<compile_context>
chip_gen: v7x
topology: tpu7x:2x2x1
jax: 0.10.0
libtpu: 0.0.40
codegen_flags: <defaults>
</compile_context>

<pallas_src>
import functools

import jax
import jax.numpy as jnp
from jax.experimental import pallas as pl
from jax.experimental.pallas import tpu as pltpu


def _cdiv(a, b):
    return -(-a // b)


# ---------------------------------------------------------------------------
# fun_system: weighted Hermite function system, params = (dilation, shift)
# Returns (phi, dphi) like FunSystem.__call__ in WHVPNet:
#   phi:  (num_coeffs, num_samples)
#   dphi: (num_params, num_coeffs, num_samples)
# ---------------------------------------------------------------------------
def make_hermite_fun_system(num_coeffs: int, num_samples: int):
    t = jnp.linspace(-1.0, 1.0, num_samples, dtype=jnp.float32)

    def phi_of_params(params):
        dilation, shift = params[0], params[1]
        u = dilation * (t - shift)                      # (N,)
        w = jnp.exp(-0.5 * u * u)                       # Gaussian weight
        h_prev = jnp.ones_like(u)                       # H_0
        h_curr = 2.0 * u                                # H_1
        rows = [h_prev * w]
        if num_coeffs > 1:
            rows.append(h_curr * w)
        for k in range(1, num_coeffs - 1):
            h_next = 2.0 * u * h_curr - 2.0 * k * h_prev
            h_prev, h_curr = h_curr, h_next
            rows.append(h_curr * w)
        phi = jnp.stack(rows, axis=0)                   # (C, N)
        norm = jnp.sqrt(jnp.sum(phi * phi, axis=-1, keepdims=True) + 1e-12)
        return phi / norm

    def fun_system(params):
        phi = phi_of_params(params)
        # dphi[p, c, n] = d phi[c, n] / d params[p]
        dphi = jnp.moveaxis(jax.jacfwd(phi_of_params)(params), -1, 0)
        return phi, dphi

    return fun_system


# ---------------------------------------------------------------------------
# Pallas kernel: per batch-tile VP projection
# ---------------------------------------------------------------------------
def _vp_kernel(x_ref, phip_ref, phi_ref, cr_ref, xhat_ref, res_ref):
    C = phi_ref.shape[0]
    x = x_ref[...]                                                    # (tm, N)
    # coeffs = x @ pinv(phi); standard contraction (LHS-K on lanes, RHS-K on
    # sublanes) so the resident (N, C) operand needs no per-step relayout.
    coeffs = jnp.dot(x, phip_ref[...],
                     preferred_element_type=jnp.float32)              # (tm, C)
    x_hat = jnp.dot(coeffs, phi_ref[...],
                    preferred_element_type=jnp.float32)               # (tm, N)
    res = x - x_hat
    xhat_ref[...] = x_hat
    res_ref[...] = res
    # Narrow outputs packed into a single (tm, C+1) slab: [coeffs | r2].
    cr_ref[:, :C] = coeffs
    cr_ref[:, C:] = jnp.sum(res * res, axis=-1, keepdims=True)        # (tm, 1)


def _vmem_capacity_bytes():
    try:
        info = pltpu.get_tpu_info()
        cap = getattr(info, "vmem_capacity_bytes", None)
        if cap:
            return int(cap)
    except Exception:
        pass
    return 128 * 1024 * 1024


def _choose_tile(B, N, C, vmem_cap):
    """Pick batch tile tm and the scoped-VMEM limit, generation-aware.

    v7x has only 64 MiB physical VMEM (vs 128 MiB on v5e/v6e), so its tile
    budget / scoped limit are lower.  row_bytes counts every per-row stream
    the pipeline double-buffers (x, x_hat, res, coeffs|r2); the resident
    phi / phip (double-buffered) are subtracted from the budget.
    """
    is_small_vmem = vmem_cap <= 64 * 1024 * 1024                 # v7x
    tile_budget = (24 if is_small_vmem else 64) * 1024 * 1024
    vmem_limit = (40 if is_small_vmem else 100) * 1024 * 1024

    row_bytes = 4 * (3 * N + C + 1)              # x + x_hat + res + (coeffs|r2), f32
    resident = 2 * (2 * 4 * C * N)               # phi + phip, double-buffered
    avail = max(tile_budget - resident, 2 * 1024 * 1024)
    tm_cap = max(8, (avail // (2 * row_bytes)) // 8 * 8)         # 2x-buffered tiles
    tm_cap = min(tm_cap, 2048)

    B8 = _cdiv(B, 8) * 8
    if B8 <= 8:
        return 8, vmem_limit

    # Keep >= 2 grid steps (>= 4 when the batch allows) so the pipeline ramps
    # and v7x can shard the parallel axis across both TensorCores.
    target_steps = 4 if B8 >= 32 else 2
    tm = min(tm_cap, max(8, (B8 // target_steps) // 8 * 8))

    # Best effort: prefer an even step count (v7x megacore balance).
    steps = _cdiv(B8, tm)
    if steps > 1 and steps % 2 == 1:
        tm_even = max(8, (B8 // (steps + 1)) // 8 * 8)
        if _cdiv(B8, tm_even) % 2 == 0:
            tm = tm_even
    return tm, vmem_limit


@functools.partial(jax.jit, static_argnames=("tm", "vmem_limit"))
def _vp_pallas(x2d, phip, phi, *, tm, vmem_limit):
    B, N = x2d.shape
    C = phi.shape[0]
    grid = (_cdiv(B, tm),)                      # ragged last tile, no pad copy

    flops = 4 * B * N * C + 3 * B * N
    bytes_accessed = 4 * (3 * B * N + B * (C + 1) + 2 * C * N)

    cr, x_hat, res = pl.pallas_call(
        _vp_kernel,
        out_shape=(
            jax.ShapeDtypeStruct((B, C + 1), jnp.float32),   # [coeffs | r2]
            jax.ShapeDtypeStruct((B, N), jnp.float32),       # x_hat
            jax.ShapeDtypeStruct((B, N), jnp.float32),       # res
        ),
        grid_spec=pltpu.PrefetchScalarGridSpec(
            num_scalar_prefetch=0,
            grid=grid,
            in_specs=[
                pl.BlockSpec((tm, N), lambda i: (i, 0)),     # x tile (streamed)
                pl.BlockSpec((N, C), lambda i: (0, 0)),      # pinv(phi), resident
                pl.BlockSpec((C, N), lambda i: (0, 0)),      # phi, resident
            ],
            out_specs=[
                pl.BlockSpec((tm, C + 1), lambda i: (i, 0)),  # coeffs | r2
                pl.BlockSpec((tm, N), lambda i: (i, 0)),      # x_hat
                pl.BlockSpec((tm, N), lambda i: (i, 0)),      # res
            ],
        ),
        compiler_params=pltpu.CompilerParams(
            dimension_semantics=("parallel",),
            vmem_limit_bytes=vmem_limit,
        ),
        cost_estimate=pl.CostEstimate(
            flops=flops, transcendentals=0, bytes_accessed=bytes_accessed),
    )(x2d, phip, phi)
    return cr, x_hat, res


# ---------------------------------------------------------------------------
# VPLayer equivalent (forward only)
# ---------------------------------------------------------------------------
class VPLayerPallas:
    def __init__(self, params_init, fun_system):
        self.params = jnp.asarray(params_init, dtype=jnp.float32)
        self.fun_system = fun_system
        self._basis_cache = None     # (params, phi, phip) — hoisted basis setup

    def _basis(self):
        # Basis construction hoisted out of the hot path: params are static
        # across repeated forwards, so phi / pinv(phi) are computed once.
        if self._basis_cache is None or self._basis_cache[0] is not self.params:
            phi, _dphi = self.fun_system(self.params)          # phi: (C, N)
            phi = phi.astype(jnp.float32)
            phip = jnp.linalg.pinv(phi).astype(jnp.float32)    # (N, C), un-transposed
            self._basis_cache = (self.params, phi, phip)
        return self._basis_cache[1], self._basis_cache[2]

    def __call__(self, x):
        phi, phip = self._basis()
        x = jnp.asarray(x, dtype=jnp.float32)
        batch_dims = x.shape[:-1]
        N = x.shape[-1]
        C = phi.shape[0]
        x2d = x.reshape(-1, N)
        B = x2d.shape[0]

        tm, vmem_limit = _choose_tile(B, N, C, _vmem_capacity_bytes())
        cr, x_hat, res = _vp_pallas(x2d, phip, phi, tm=tm, vmem_limit=vmem_limit)

        coeffs = cr[:, :C].reshape(*batch_dims, C)
        r2 = cr[:, C].reshape(batch_dims)
        x_hat = x_hat.reshape(*batch_dims, N)
        res = res.reshape(*batch_dims, N)
        return coeffs, x_hat, res, r2


def _reference(x, phi):
    phi = phi.astype(jnp.float32)
    phip = jnp.linalg.pinv(phi)
    coeffs = x @ phip
    x_hat = coeffs @ phi
    res = x - x_hat
    r2 = jnp.sum(res ** 2, axis=-1)
    return coeffs, x_hat, res, r2


if __name__ == "__main__":
    # Small shapes consistent with the module: x of size (batch, *, num_samples)
    batch, star, num_samples, num_coeffs = 2, 8, 16, 8

    key = jax.random.PRNGKey(0)
    k1, k2 = jax.random.split(key)
    x = jax.random.normal(k1, (batch, star, num_samples), dtype=jnp.float32)

    params_init = jnp.array([2.0, 0.1], dtype=jnp.float32)   # (num_params,)
    fun_system = make_hermite_fun_system(num_coeffs, num_samples)

    layer = VPLayerPallas(params_init, fun_system)
    coeffs, x_hat, res, r2 = layer(x)
    jax.block_until_ready((coeffs, x_hat, res, r2))

    # Pure-JAX reference check of the projection math.
    phi, _ = fun_system(layer.params)
    coeffs_ref, x_hat_ref, res_ref, r2_ref = _reference(x, phi)

    assert coeffs.shape == (batch, star, num_coeffs)
    assert x_hat.shape == (batch, star, num_samples)
    assert res.shape == (batch, star, num_samples)
    assert r2.shape == (batch, star)
    assert jnp.allclose(coeffs, coeffs_ref, atol=1e-4, rtol=1e-4)
    assert jnp.allclose(x_hat, x_hat_ref, atol=1e-4, rtol=1e-4)
    assert jnp.allclose(res, res_ref, atol=1e-4, rtol=1e-4)
    assert jnp.allclose(r2, r2_ref, atol=1e-3, rtol=1e-3)

    # Second case: flattened batch NOT a tile multiple (ragged last tile path,
    # no wrapper pad copy).
    x_odd = jax.random.normal(k2, (3, 5, num_samples), dtype=jnp.float32)
    c2, xh2, rs2, r22 = layer(x_odd)
    jax.block_until_ready((c2, xh2, rs2, r22))
    c2_ref, xh2_ref, rs2_ref, r22_ref = _reference(x_odd, phi)
    assert c2.shape == (3, 5, num_coeffs)
    assert xh2.shape == (3, 5, num_samples)
    assert rs2.shape == (3, 5, num_samples)
    assert r22.shape == (3, 5)
    assert jnp.allclose(c2, c2_ref, atol=1e-4, rtol=1e-4)
    assert jnp.allclose(xh2, xh2_ref, atol=1e-4, rtol=1e-4)
    assert jnp.allclose(rs2, rs2_ref, atol=1e-4, rtol=1e-4)
    assert jnp.allclose(r22, r22_ref, atol=1e-3, rtol=1e-3)

    print("KERNEL_OK")
</pallas_src>

<mosaic_0001>
module attributes {stable_mosaic.version = 11 : i64} {
  func.func @_vp_kernel(%arg0: i32, %arg1: memref<8x16xf32, #tpu.memory_space<vmem>>, %arg2: memref<16x8xf32, #tpu.memory_space<vmem>>, %arg3: memref<8x16xf32, #tpu.memory_space<vmem>>, %arg4: memref<8x9xf32, #tpu.memory_space<vmem>>, %arg5: memref<8x16xf32, #tpu.memory_space<vmem>>, %arg6: memref<8x16xf32, #tpu.memory_space<vmem>>) attributes {dimension_semantics = [#tpu.dimension_semantics<parallel>], iteration_bounds = array<i64: 2>, scalar_prefetch = 0 : i64, scratch_operands = 0 : i64, tpu.core_type = #tpu.core_type<tc>, window_params = [{transform_indices = @transform_0, window_bounds = array<i64: 8, 16>}, {pipeline_mode = #tpu.pipeline_mode<synchronous>, transform_indices = @transform_1, window_bounds = array<i64: 16, 8>}, {pipeline_mode = #tpu.pipeline_mode<synchronous>, transform_indices = @transform_2, window_bounds = array<i64: 8, 16>}, {transform_indices = @transform_3, window_bounds = array<i64: 8, 9>}, {transform_indices = @transform_4, window_bounds = array<i64: 8, 16>}, {transform_indices = @transform_5, window_bounds = array<i64: 8, 16>}]} {
    %c0 = arith.constant 0 : index
    %c0_0 = arith.constant 0 : index
    %0 = vector.load %arg1[%c0, %c0_0] : memref<8x16xf32, #tpu.memory_space<vmem>>, vector<8x16xf32>
    %c0_1 = arith.constant 0 : index
    %c0_2 = arith.constant 0 : index
    %1 = vector.load %arg2[%c0_1, %c0_2] : memref<16x8xf32, #tpu.memory_space<vmem>>, vector<16x8xf32>
    %cst = arith.constant dense<0.000000e+00> : vector<8x8xf32>
    %2 = tpu.matmul %0, %1, %cst {dimension_numbers = #tpu.dot_dimension_numbers<[1], [0], [0], [1], [0, 0, 1, 1], [], []>} : vector<8x16xf32>, vector<16x8xf32>, vector<8x8xf32> -> vector<8x8xf32>
    %c0_3 = arith.constant 0 : index
    %c0_4 = arith.constant 0 : index
    %3 = vector.load %arg3[%c0_3, %c0_4] : memref<8x16xf32, #tpu.memory_space<vmem>>, vector<8x16xf32>
    %cst_5 = arith.constant dense<0.000000e+00> : vector<8x16xf32>
    %4 = tpu.matmul %2, %3, %cst_5 {dimension_numbers = #tpu.dot_dimension_numbers<[1], [0], [0], [1], [0, 0, 1, 1], [], []>} : vector<8x8xf32>, vector<8x16xf32>, vector<8x16xf32> -> vector<8x16xf32>
    %5 = arith.subf %0, %4 : vector<8x16xf32>
    %c0_6 = arith.constant 0 : index
    %c0_7 = arith.constant 0 : index
    %6 = vector.load %arg5[%c0_6, %c0_7] : memref<8x16xf32, #tpu.memory_space<vmem>>, vector<8x16xf32>
    tpu.vector_store %arg5[%c0_6, %c0_7], %4 {strides = array<i32>} : memref<8x16xf32, #tpu.memory_space<vmem>>, vector<8x16xf32>,
    %c0_8 = arith.constant 0 : index
    %c0_9 = arith.constant 0 : index
    %7 = vector.load %arg6[%c0_8, %c0_9] : memref<8x16xf32, #tpu.memory_space<vmem>>, vector<8x16xf32>
    tpu.vector_store %arg6[%c0_8, %c0_9], %5 {strides = array<i32>} : memref<8x16xf32, #tpu.memory_space<vmem>>, vector<8x16xf32>,
    %c0_10 = arith.constant 0 : index
    %c0_11 = arith.constant 0 : index
    %8 = vector.load %arg4[%c0_10, %c0_11] : memref<8x9xf32, #tpu.memory_space<vmem>>, vector<8x8xf32>
    tpu.vector_store %arg4[%c0_10, %c0_11], %2 {strides = array<i32>} : memref<8x9xf32, #tpu.memory_space<vmem>>, vector<8x8xf32>,
    %9 = arith.mulf %5, %5 : vector<8x16xf32>
    %cst_12 = arith.constant dense<0.000000e+00> : vector<8xf32>
    %10 = vector.multi_reduction <add>, %9, %cst_12 [1] : vector<8x16xf32> to vector<8xf32>
    %11 = vector.shape_cast %10 : vector<8xf32> to vector<8x1xf32>
    %c0_13 = arith.constant 0 : index
    %c8 = arith.constant 8 : index
    %12 = vector.load %arg4[%c0_13, %c8] : memref<8x9xf32, #tpu.memory_space<vmem>>, vector<8x1xf32>
    tpu.vector_store %arg4[%c0_13, %c8], %11 {strides = array<i32>} : memref<8x9xf32, #tpu.memory_space<vmem>>, vector<8x1xf32>,
    return
  }
  func.func @transform_0(%arg0: i32) -> (i32, i32) {
    %c0_i32 = arith.constant 0 : i32
    %c0_i32_0 = arith.constant 0 : i32
    return %arg0, %c0_i32 : i32, i32
  }
  func.func @transform_1(%arg0: i32) -> (i32, i32) {
    %c0_i32 = arith.constant 0 : i32
    %c0_i32_0 = arith.constant 0 : i32
    %c0_i32_1 = arith.constant 0 : i32
    return %c0_i32, %c0_i32_0 : i32, i32
  }
  func.func @transform_2(%arg0: i32) -> (i32, i32) {
    %c0_i32 = arith.constant 0 : i32
    %c0_i32_0 = arith.constant 0 : i32
    %c0_i32_1 = arith.constant 0 : i32
    return %c0_i32, %c0_i32_0 : i32, i32
  }
  func.func @transform_3(%arg0: i32) -> (i32, i32) {
    %c0_i32 = arith.constant 0 : i32
    %c0_i32_0 = arith.constant 0 : i32
    return %arg0, %c0_i32 : i32, i32
  }
  func.func @transform_4(%arg0: i32) -> (i32, i32) {
    %c0_i32 = arith.constant 0 : i32
    %c0_i32_0 = arith.constant 0 : i32
    return %arg0, %c0_i32 : i32, i32
  }
  func.func @transform_5(%arg0: i32) -> (i32, i32) {
    %c0_i32 = arith.constant 0 : i32
    %c0_i32_0 = arith.constant 0 : i32
    return %arg0, %c0_i32 : i32, i32
  }
}

</mosaic_0001>

<llo_original>
// kernel: _vp_pallas.1
$region0: #{_vp_pallas.1}
  #allocation0 [shape = 'u32[]', space=smem, size = 0x4, offset = 0x4, fixed_abs, tag = 'smem constant byte address 0x4 - core index']
  #allocation1 [shape = 'u32[144,128]{1,0:T(1,128)}', space=vmem, size = 0x12000, scoped, tag = 'internal scratch']
  %s0 = inlined_call_operand.hbm [shape: f32[16,16], index: 0, kind: input, shape index: {}]
  %s1 = inlined_call_operand.hbm [shape: f32[16,8], index: 1, kind: input, shape index: {}]
  %s2 = inlined_call_operand.hbm [shape: f32[8,16], index: 2, kind: input, shape index: {}]
  %s3 = inlined_call_operand.hbm [shape: f32[16,9], index: 3, kind: output, shape index: {0}]
  %s4 = inlined_call_operand.hbm [shape: f32[16,16], index: 4, kind: output, shape index: {1}]
  %s5 = inlined_call_operand.hbm [shape: f32[16,16], index: 5, kind: output, shape index: {2}]
  %6 = xla_tuple %s3, %s4, %s5
  %s7 = sld [smem:[#allocation0]]
  $region73: #{_vp_pallas.1} parent=0
    _
  %s9 = ssub.s32 1, %s7
  %s10 = scalar_select 0, %s9, %s7
  $region1: #{_vp_pallas.1} parent=0
    #allocation2 [shape = 'u8[8192]{0}', space=vmem, size = 0x2000, scoped, tag = 'input window, operand 0']
    #allocation3 [shape = 's32[2]{0}', space=sflag, size = 0x8, scoped, tag = 'scoped memory for _vp_pallas.1']
    #allocation4 [shape = 's32[2]{0}', space=sflag, size = 0x8, scoped, tag = 'scoped memory for _vp_pallas.1']
    #allocation5 [shape = 'u8[8192]{0}', space=vmem, size = 0x2000, scoped, tag = 'input window, operand 1, single buffered']
    #allocation6 [shape = 's32[1]{0}', space=sflag, size = 0x4, scoped, tag = 'scoped memory for _vp_pallas.1']
    #allocation7 [shape = 'u8[4096]{0}', space=vmem, size = 0x1000, scoped, tag = 'input window, operand 2, single buffered']
    #allocation8 [shape = 'u8[8192]{0}', space=vmem, size = 0x2000, scoped, tag = 'output window, operand 0']
    #allocation9 [shape = 'u8[8192]{0}', space=vmem, size = 0x2000, scoped, tag = 'output window, operand 1']
    #allocation10 [shape = 's32[2]{0}', space=sflag, size = 0x8, scoped, tag = 'scoped memory for _vp_pallas.1']
    #allocation11 [shape = 'u8[8192]{0}', space=vmem, size = 0x2000, scoped, tag = 'output window, operand 2']
    %11 = vsyncpa [#allocation3], 0
    %s12 = scalar_lea.sflag [#allocation3], 1
    %13 = vsyncpa %s12, 0
    %14 = vsyncpa [#allocation6], 0
    %15 = vsyncpa [#allocation4], 0
    %s16 = scalar_lea.sflag [#allocation4], 1
    %17 = vsyncpa %s16, 0
    %18 = vsyncpa [#allocation10], 0
    %s19 = scalar_lea.sflag [#allocation10], 1
    %20 = vsyncpa %s19, 0
    loop: start=0, step=1, limit=4
    $region2: #{_vp_pallas.1} parent=1 // loop_pre_header
      _
    $region3: #{_vp_pallas.1} parent=1 // loop_header
      %s22 = sphi 0, %s26
      %p23 = scmp.ge.s32.totalorder %s22, 4
      %s32 = sphi 0, %s34
      %s35 = sphi 0, %s32
      %s36 = sphi 0, %s35
      %s52 = sphi 0, %s36
      %s56 = sphi 0, %s56
      %s58 = sphi 0, %s56
      %s59 = sphi 0, %s58
      %s73 = sphi 0, %s59
      %s77 = sphi 0, %s77
      %s79 = sphi 0, %s77
      %s80 = sphi 0, %s79
      %s94 = sphi 0, %s80
      %s100 = sphi 0, %s102
      %s103 = sphi 0, %s100
      %s104 = sphi 0, %s103
      %s120 = sphi 0, %s104
      %s126 = sphi 0, %s128
      %s129 = sphi 0, %s126
      %s130 = sphi 0, %s129
      %s146 = sphi 0, %s130
      %s152 = sphi 0, %s154
      %s155 = sphi 0, %s152
      %s156 = sphi 0, %s155
      %s172 = sphi 0, %s156
    $region4: #{_vp_pallas.1} parent=1 // loop_header_branch
      %25 = sbr.rel (%p23) target = $region8
    $region5: #{_vp_pallas.1} parent=1 // loop_body
      %s27 = ssub.s32 %s22, 1
      %s28 = ssub.s32 %s22, 2
      %s29 = sadd.s32 %s22, 1
      %s30 = ssub.s32 %s22, %s29
      %p31 = scmp.eq.s32.totalorder %s30, 0
      %s33 = sadd.s32 %s32, 1
      %s34 = scalar_select %p31, %s32, %s33
      %p37 = pneg %p31
      %p38 = scmp.eq.s32.totalorder %s22, 1
      %p39 = por %p37, %p38
      %p40 = scmp.ne.s32.totalorder %s32, %s35
      %p41 = scmp.eq.s32.totalorder %s22, 0
      %p42 = por %p40, %p41
      %p43 = scmp.ne.s32.totalorder %s32, %s35
      %p44 = scmp.eq.s32.totalorder %s27, 1
      %p45 = por %p43, %p44
      %p46 = scmp.ne.s32.totalorder %s35, %s36
      %p47 = scmp.eq.s32.totalorder %s27, 0
      %p48 = por %p46, %p47
      %p49 = scmp.ne.s32.totalorder %s35, %s36
      %p50 = scmp.eq.s32.totalorder %s28, 1
      %p51 = por %p49, %p50
      %p53 = scmp.ne.s32.totalorder %s36, %s52
      %p54 = scmp.eq.s32.totalorder %s28, 0
      %p55 = por %p53, %p54
      %s57 = sadd.s32 %s56, 1
      %p60 = scmp.eq.s32.totalorder %s22, 1
      %p61 = scmp.ne.s32.totalorder %s56, %s58
      %p62 = scmp.eq.s32.totalorder %s22, 0
      %p63 = por %p61, %p62
      %p64 = scmp.ne.s32.totalorder %s56, %s58
      %p65 = scmp.eq.s32.totalorder %s27, 1
      %p66 = por %p64, %p65
      %p67 = scmp.ne.s32.totalorder %s58, %s59
      %p68 = scmp.eq.s32.totalorder %s27, 0
      %p69 = por %p67, %p68
      %p70 = scmp.ne.s32.totalorder %s58, %s59
      %p71 = scmp.eq.s32.totalorder %s28, 1
      %p72 = por %p70, %p71
      %p74 = scmp.ne.s32.totalorder %s59, %s73
      %p75 = scmp.eq.s32.totalorder %s28, 0
      %p76 = por %p74, %p75
      %s78 = sadd.s32 %s77, 1
      %p81 = scmp.eq.s32.totalorder %s22, 1
      %p82 = scmp.ne.s32.totalorder %s77, %s79
      %p83 = scmp.eq.s32.totalorder %s22, 0
      %p84 = por %p82, %p83
      %p85 = scmp.ne.s32.totalorder %s77, %s79
      %p86 = scmp.eq.s32.totalorder %s27, 1
      %p87 = por %p85, %p86
      %p88 = scmp.ne.s32.totalorder %s79, %s80
      %p89 = scmp.eq.s32.totalorder %s27, 0
      %p90 = por %p88, %p89
      %p91 = scmp.ne.s32.totalorder %s79, %s80
      %p92 = scmp.eq.s32.totalorder %s28, 1
      %p93 = por %p91, %p92
      %p95 = scmp.ne.s32.totalorder %s80, %s94
      %p96 = scmp.eq.s32.totalorder %s28, 0
      %p97 = por %p95, %p96
      %s98 = ssub.s32 %s22, %s29
      %p99 = scmp.eq.s32.totalorder %s98, 0
      %s101 = sadd.s32 %s100, 1
      %s102 = scalar_select %p99, %s100, %s101
      %p105 = pneg %p99
      %p106 = scmp.eq.s32.totalorder %s22, 1
      %p107 = por %p105, %p106
      %p108 = scmp.ne.s32.totalorder %s100, %s103
      %p109 = scmp.eq.s32.totalorder %s22, 0
      %p110 = por %p108, %p109
      %p111 = scmp.ne.s32.totalorder %s100, %s103
      %p112 = scmp.eq.s32.totalorder %s27, 1
      %p113 = por %p111, %p112
      %p114 = scmp.ne.s32.totalorder %s103, %s104
      %p115 = scmp.eq.s32.totalorder %s27, 0
      %p116 = por %p114, %p115
      %p117 = scmp.ne.s32.totalorder %s103, %s104
      %p118 = scmp.eq.s32.totalorder %s28, 1
      %p119 = por %p117, %p118
      %p121 = scmp.ne.s32.totalorder %s104, %s120
      %p122 = scmp.eq.s32.totalorder %s28, 0
      %p123 = por %p121, %p122
      %s124 = ssub.s32 %s22, %s29
      %p125 = scmp.eq.s32.totalorder %s124, 0
      %s127 = sadd.s32 %s126, 1
      %s128 = scalar_select %p125, %s126, %s127
      %p131 = pneg %p125
      %p132 = scmp.eq.s32.totalorder %s22, 1
      %p133 = por %p131, %p132
      %p134 = scmp.ne.s32.totalorder %s126, %s129
      %p135 = scmp.eq.s32.totalorder %s22, 0
      %p136 = por %p134, %p135
      %p137 = scmp.ne.s32.totalorder %s126, %s129
      %p138 = scmp.eq.s32.totalorder %s27, 1
      %p139 = por %p137, %p138
      %p140 = scmp.ne.s32.totalorder %s129, %s130
      %p141 = scmp.eq.s32.totalorder %s27, 0
      %p142 = por %p140, %p141
      %p143 = scmp.ne.s32.totalorder %s129, %s130
      %p144 = scmp.eq.s32.totalorder %s28, 1
      %p145 = por %p143, %p144
      %p147 = scmp.ne.s32.totalorder %s130, %s146
      %p148 = scmp.eq.s32.totalorder %s28, 0
      %p149 = por %p147, %p148
      %s150 = ssub.s32 %s22, %s29
      %p151 = scmp.eq.s32.totalorder %s150, 0
      %s153 = sadd.s32 %s152, 1
      %s154 = scalar_select %p151, %s152, %s153
      %p157 = pneg %p151
      %p158 = scmp.eq.s32.totalorder %s22, 1
      %p159 = por %p157, %p158
      %p160 = scmp.ne.s32.totalorder %s152, %s155
      %p161 = scmp.eq.s32.totalorder %s22, 0
      %p162 = por %p160, %p161
      %p163 = scmp.ne.s32.totalorder %s152, %s155
      %p164 = scmp.eq.s32.totalorder %s27, 1
      %p165 = por %p163, %p164
      %p166 = scmp.ne.s32.totalorder %s155, %s156
      %p167 = scmp.eq.s32.totalorder %s27, 0
      %p168 = por %p166, %p167
      %p169 = scmp.ne.s32.totalorder %s155, %s156
      %p170 = scmp.eq.s32.totalorder %s28, 1
      %p171 = por %p169, %p170
      %p173 = scmp.ne.s32.totalorder %s156, %s172
      %p174 = scmp.eq.s32.totalorder %s28, 0
      %p175 = por %p173, %p174
      %p176 = scmp.le.s32.totalorder 1, %s22
      %p177 = scmp.lt.s32.totalorder %s22, 3
      %p178 = pnand %p176, %p177
      %p179 = pneg %p178
      // Predicated region
      $region9: #{_vp_pallas.1} parent=5 // pred_check
        _
      $region10: #{_vp_pallas.1} parent=5 // pred_check_branch
        %181 = sbr.rel (%p178) target = $region12
      $region11: #{_vp_pallas.1} parent=5 // pred_region
        %s182 = ssub.s32 %s22, 1
        // Predicated region
        $region13: #{_vp_pallas.1} parent=11 // pred_check
          %p183 = pneg %p69
        $region14: #{_vp_pallas.1} parent=11 // pred_check_branch
          %185 = sbr.rel (%p183) target = $region16
        $region15: #{_vp_pallas.1} parent=11 // pred_region
          %s187 = ssub.s32 256, 256
          %188 = vsyncadd [#allocation6], %s187
          %s189 = sshll.u32 [#allocation5], 4
          %s190 = int_to_ptr.vmem [resolvable:$true] %s189
          %195 = dma.hbm_to_vmem [thread:$0]  %s1, 256, %s190, [#allocation6], 128, 128, 8
        $region16: #{_vp_pallas.1} parent=11 // pred_fallthru
          _
        // Predicated region
        $region17: #{_vp_pallas.1} parent=11 // pred_check
          %p196 = pneg %p90
        $region18: #{_vp_pallas.1} parent=11 // pred_check_branch
          %198 = sbr.rel (%p196) target = $region20
        $region19: #{_vp_pallas.1} parent=11 // pred_region
          %s200 = ssub.s32 128, 128
          %201 = vsyncadd [#allocation6], %s200
          %s203 = sshll.u32 [#allocation7], 4
          %s204 = int_to_ptr.vmem [resolvable:$true] %s203
          %206 = dma.hbm_to_vmem [thread:$0]  %s2, 128, %s204, [#allocation6]
        $region20: #{_vp_pallas.1} parent=11 // pred_fallthru
          _
      $region12: #{_vp_pallas.1} parent=5 // pred_fallthru
        _
      %p207 = scmp.lt.s32.totalorder %s22, 2
      // Predicated region
      $region21: #{_vp_pallas.1} parent=5 // pred_check
        %p208 = pneg %p207
      $region22: #{_vp_pallas.1} parent=5 // pred_check_branch
        %210 = sbr.rel (%p208) target = $region24
      $region23: #{_vp_pallas.1} parent=5 // pred_region
        // Predicated region
        $region25: #{_vp_pallas.1} parent=23 // pred_check
          %p211 = pneg %p42
        $region26: #{_vp_pallas.1} parent=23 // pred_check_branch
          %213 = sbr.rel (%p211) target = $region28
        $region27: #{_vp_pallas.1} parent=23 // pred_region
          %s214 = sand.u32 %s32, 1
          %s215 = scalar_lea.sflag [#allocation3], %s214
          %s216 = sand.u32 %s32, 1
          %s217 = smul.addr %s216, 8
          %s218 = scalar_lea.vmem [#allocation2], %s217
          %s220 = ssub.s32 128, 128
          %221 = vsyncadd %s215, %s220
          %s222 = smul.addr %s22, 128
          %s223 = scalar_lea.hbm %s0, %s222
          %s225 = sshll.u32 %s218, 4
          %s226 = int_to_ptr.vmem [resolvable:$true] %s225
          %228 = dma.hbm_to_vmem [thread:$0]  %s223, 128, %s226, %s215
        $region28: #{_vp_pallas.1} parent=23 // pred_fallthru
          _
      $region24: #{_vp_pallas.1} parent=5 // pred_fallthru
        _
      %p229 = scmp.le.s32.totalorder 1, %s22
      %p230 = scmp.lt.s32.totalorder %s22, 3
      %p231 = pnand %p229, %p230
      %p232 = pneg %p231
      // Predicated region
      $region29: #{_vp_pallas.1} parent=5 // pred_check
        _
      $region30: #{_vp_pallas.1} parent=5 // pred_check_branch
        %234 = sbr.rel (%p231) target = $region32
      $region31: #{_vp_pallas.1} parent=5 // pred_region
        %s235 = ssub.s32 %s22, 1
        %s236 = sand.u32 %s35, 1
        %s237 = scalar_lea.sflag [#allocation3], %s236
        %s238 = sand.u32 %s35, 1
        %s239 = smul.addr %s238, 8
        %s240 = scalar_lea.vmem [#allocation2], %s239
        // Predicated region
        $region33: #{_vp_pallas.1} parent=31 // pred_check
          %p241 = pneg %p48
        $region34: #{_vp_pallas.1} parent=31 // pred_check_branch
          %243 = sbr.rel (%p241) target = $region36
        $region35: #{_vp_pallas.1} parent=31 // pred_region
          %244 = dma.done %s237, 128
        $region36: #{_vp_pallas.1} parent=31 // pred_fallthru
          _
        // Predicated region
        $region37: #{_vp_pallas.1} parent=31 // pred_check
          %p245 = pneg %p69
        $region38: #{_vp_pallas.1} parent=31 // pred_check_branch
          %247 = sbr.rel (%p245) target = $region40
        $region39: #{_vp_pallas.1} parent=31 // pred_region
          %248 = dma.done [#allocation6], 256
        $region40: #{_vp_pallas.1} parent=31 // pred_fallthru
          _
        // Predicated region
        $region41: #{_vp_pallas.1} parent=31 // pred_check
          %p249 = pneg %p90
        $region42: #{_vp_pallas.1} parent=31 // pred_check_branch
          %251 = sbr.rel (%p249) target = $region44
        $region43: #{_vp_pallas.1} parent=31 // pred_region
          %252 = dma.done [#allocation6], 128
        $region44: #{_vp_pallas.1} parent=31 // pred_fallthru
          _
        %s253 = sand.u32 %s35, 1
        %s254 = scalar_lea.sflag [#allocation3], %s253
        %s255 = sand.u32 %s35, 1
        %s256 = smul.addr %s255, 8
        %s257 = scalar_lea.vmem [#allocation2], %s256
        %p258 = pneg %p48
        %p259 = pneg %p45
        %p260 = pneg %p69
        %p261 = pneg %p66
        %p262 = pneg %p90
        %p263 = pneg %p87
        %p264 = pneg %p116
        %p265 = pneg %p113
        %s266 = sand.u32 %s103, 1
        %s267 = scalar_lea.sflag [#allocation4], %s266
        %s268 = sand.u32 %s103, 1
        %s269 = smul.addr %s268, 8
        %s270 = scalar_lea.vmem [#allocation8], %s269
        %p271 = pneg %p142
        %p272 = pneg %p139
        %s273 = sand.u32 %s27, 1
        %s274 = scalar_lea.sflag [#allocation10], %s273
        %s275 = sand.u32 %s129, 1
        %s276 = smul.addr %s275, 8
        %s277 = scalar_lea.vmem [#allocation9], %s276
        %p278 = pneg %p168
        %p279 = pneg %p165
        %s280 = sand.u32 %s27, 1
        %s281 = scalar_lea.sflag [#allocation10], %s280
        %s282 = sand.u32 %s155, 1
        %s283 = smul.addr %s282, 8
        %s284 = scalar_lea.vmem [#allocation11], %s283
        %v285 = vld [vmem:[%s240] sm:$0xff]
        %v286 = vld [vmem:[#allocation5] sm:$0xff]
        %v287 = vld [vmem:[#allocation5 + $0x8] sm:$0xff]
        %vm288 = vcmask 130048
        %v290 = vsel %vm288, %v285, 0
        %292 = vmatprep.subr.mxu0 0.0
        %293 = vmatpush1.msra.mxu0 %v286
        %294 = vmatprep.subr.mxu0 0.0
        %295 = vmatpush1.msra.mxu0 %v287
        %296 = vmatprep.subr.mxu0 0.0
        %297 = vmatpush1.msra.mxu0 0.0
        %298 = vmatprep.subr.mxu0 0.0
        %299 = vmatpush1.msra.mxu0 0.0
        %300 = vmatprep.subr.mxu0 0.0
        %301 = vmatpush1.msra.mxu0 0.0
        %302 = vmatprep.subr.mxu0 0.0
        %303 = vmatpush1.msra.mxu0 0.0
        %304 = vmatprep.subr.mxu0 0.0
        %305 = vmatpush1.msra.mxu0 0.0
        %306 = vmatprep.subr.mxu0 0.0
        %307 = vmatpush1.msra.mxu0 0.0
        %308 = vmatprep.subr.mxu0 0.0
        %309 = vmatpush1.msra.mxu0 0.0
        %310 = vmatprep.subr.mxu0 0.0
        %311 = vmatpush1.msra.mxu0 0.0
        %312 = vmatprep.subr.mxu0 0.0
        %313 = vmatpush1.msra.mxu0 0.0
        %314 = vmatprep.subr.mxu0 0.0
        %315 = vmatpush1.msra.mxu0 0.0
        %316 = vmatprep.subr.mxu0 0.0
        %317 = vmatpush1.msra.mxu0 0.0
        %318 = vmatprep.subr.mxu0 0.0
        %319 = vmatpush1.msra.mxu0 0.0
        %320 = vmatprep.subr.mxu0 0.0
        %321 = vmatpush1.msra.mxu0 0.0
        %322 = vmatprep.subr.mxu0 0.0
        %323 = vmatpush1.msra.mxu0 0.0
        %324 = vmatprep.subr.mxu0 0.0
        %325 = vmatpush1.msra.mxu0 0.0
        %326 = vmatprep.subr.mxu0 0.0
        %327 = vmatpush1.msra.mxu0 0.0
        %328 = vmatprep.subr.mxu0 0.0
        %329 = vmatpush1.msra.mxu0 0.0
        %330 = vmatprep.subr.mxu0 0.0
        %331 = vmatpush1.msra.mxu0 0.0
        %332 = vmatprep.subr.mxu0 0.0
        %333 = vmatpush1.msra.mxu0 0.0
        %334 = vmatprep.subr.mxu0 0.0
        %335 = vmatpush1.msra.mxu0 0.0
        %336 = vmatprep.subr.mxu0 0.0
        %337 = vmatpush1.msra.mxu0 0.0
        %338 = vmatprep.subr.mxu0 0.0
        %339 = vmatpush1.msra.mxu0 0.0
        %340 = vmatprep.subr.mxu0 0.0
        %341 = vmatpush1.msra.mxu0 0.0
        %342 = vmatprep.subr.mxu0 0.0
        %343 = vmatpush1.msra.mxu0 0.0
        %344 = vmatprep.subr.mxu0 0.0
        %345 = vmatpush1.msra.mxu0 0.0
        %346 = vmatprep.subr.mxu0 0.0
        %347 = vmatpush1.msra.mxu0 0.0
        %348 = vmatprep.subr.mxu0 0.0
        %349 = vmatpush1.msra.mxu0 0.0
        %350 = vmatprep.subr.mxu0 0.0
        %351 = vmatpush1.msra.mxu0 0.0
        %352 = vmatprep.subr.mxu0 0.0
        %353 = vmatpush1.msra.mxu0 0.0
        %354 = vmatprep.subr.mxu0 0.0
        %355 = vmatpush1.msra.mxu0 0.0
        %356 = vmatprep.mubr.f32.mxu0 0.0
        %357 = vmatmul.mubr.f32.gmra.mrb[0].mxu0 %v290
        %v358 = vpop.f32.mrb[0].mxu0
        %v359 = vadd.f32 0.0, %v358
        %v360 = vpop.f32.mrb[0].mxu0
        %361 = vdwg.mxu0
        %v362 = vld [vmem:[#allocation7] sm:$0xff]
        %vm363 = vcmask 64512
        %v365 = vsel %vm363, %v359, 0
        %367 = vmatprep.subr.mxu0 0.0
        %368 = vmatpush1.msra.mxu0 %v362
        %369 = vmatprep.subr.mxu0 0.0
        %370 = vmatpush1.msra.mxu0 0.0
        %371 = vmatprep.subr.mxu0 0.0
        %372 = vmatpush1.msra.mxu0 0.0
        %373 = vmatprep.subr.mxu0 0.0
        %374 = vmatpush1.msra.mxu0 0.0
        %375 = vmatprep.subr.mxu0 0.0
        %376 = vmatpush1.msra.mxu0 0.0
        %377 = vmatprep.subr.mxu0 0.0
        %378 = vmatpush1.msra.mxu0 0.0
        %379 = vmatprep.subr.mxu0 0.0
        %380 = vmatpush1.msra.mxu0 0.0
        %381 = vmatprep.subr.mxu0 0.0
        %382 = vmatpush1.msra.mxu0 0.0
        %383 = vmatprep.subr.mxu0 0.0
        %384 = vmatpush1.msra.mxu0 0.0
        %385 = vmatprep.subr.mxu0 0.0
        %386 = vmatpush1.msra.mxu0 0.0
        %387 = vmatprep.subr.mxu0 0.0
        %388 = vmatpush1.msra.mxu0 0.0
        %389 = vmatprep.subr.mxu0 0.0
        %390 = vmatpush1.msra.mxu0 0.0
        %391 = vmatprep.subr.mxu0 0.0
        %392 = vmatpush1.msra.mxu0 0.0
        %393 = vmatprep.subr.mxu0 0.0
        %394 = vmatpush1.msra.mxu0 0.0
        %395 = vmatprep.subr.mxu0 0.0
        %396 = vmatpush1.msra.mxu0 0.0
        %397 = vmatprep.subr.mxu0 0.0
        %398 = vmatpush1.msra.mxu0 0.0
        %399 = vmatprep.subr.mxu0 0.0
        %400 = vmatpush1.msra.mxu0 0.0
        %401 = vmatprep.subr.mxu0 0.0
        %402 = vmatpush1.msra.mxu0 0.0
        %403 = vmatprep.subr.mxu0 0.0
        %404 = vmatpush1.msra.mxu0 0.0
        %405 = vmatprep.subr.mxu0 0.0
        %406 = vmatpush1.msra.mxu0 0.0
        %407 = vmatprep.subr.mxu0 0.0
        %408 = vmatpush1.msra.mxu0 0.0
        %409 = vmatprep.subr.mxu0 0.0
        %410 = vmatpush1.msra.mxu0 0.0
        %411 = vmatprep.subr.mxu0 0.0
        %412 = vmatpush1.msra.mxu0 0.0
        %413 = vmatprep.subr.mxu0 0.0
        %414 = vmatpush1.msra.mxu0 0.0
        %415 = vmatprep.subr.mxu0 0.0
        %416 = vmatpush1.msra.mxu0 0.0
        %417 = vmatprep.subr.mxu0 0.0
        %418 = vmatpush1.msra.mxu0 0.0
        %419 = vmatprep.subr.mxu0 0.0
        %420 = vmatpush1.msra.mxu0 0.0
        %421 = vmatprep.subr.mxu0 0.0
        %422 = vmatpush1.msra.mxu0 0.0
        %423 = vmatprep.subr.mxu0 0.0
        %424 = vmatpush1.msra.mxu0 0.0
        %425 = vmatprep.subr.mxu0 0.0
        %426 = vmatpush1.msra.mxu0 0.0
        %427 = vmatprep.subr.mxu0 0.0
        %428 = vmatpush1.msra.mxu0 0.0
        %429 = vmatprep.subr.mxu0 0.0
        %430 = vmatpush1.msra.mxu0 0.0
        %431 = vmatprep.mubr.f32.mxu0 0.0
        %432 = vmatmul.mubr.f32.gmra.mrb[0].mxu0 %v365
        %v433 = vpop.f32.mrb[0].mxu0
        %v434 = vadd.f32 0.0, %v433
        %v435 = vpop.f32.mrb[0].mxu0
        %436 = vdwg.mxu0
        %v437 = vsub.f32 %v285, %v434
        %438 = vst.msk [vmem:[%s277] sm:$0xff] %vm288, %v434
        %439 = vst.msk [vmem:[%s284] sm:$0xff] %vm288, %v437
        %440 = vst.msk [vmem:[%s270] sm:$0xff] %vm363, %v359
        %v441 = vmul.f32 %v437, %v437
        %v442 = vsel %vm288, %v441, 0.0
        %443 = vadd.xlane.f32.xlu0 %v442
        %v444 = vpop.xlane.xlu0 %443
        %vm445 = vcmask 72768
        %446 = vst.msk [vmem:[%s270] sm:$0xff] %vm445, %v444
        %s447 = sand.u32 %s103, 1
        %s448 = scalar_lea.sflag [#allocation4], %s447
        %s449 = sand.u32 %s103, 1
        %s450 = smul.addr %s449, 8
        %s451 = scalar_lea.vmem [#allocation8], %s450
        %s452 = sand.u32 %s27, 1
        %s453 = scalar_lea.sflag [#allocation10], %s452
        %s454 = sand.u32 %s129, 1
        %s455 = smul.addr %s454, 8
        %s456 = scalar_lea.vmem [#allocation9], %s455
        %s457 = sand.u32 %s27, 1
        %s458 = scalar_lea.sflag [#allocation10], %s457
        %s459 = sand.u32 %s155, 1
        %s460 = smul.addr %s459, 8
        %s461 = scalar_lea.vmem [#allocation11], %s460
        // Predicated region
        $region45: #{_vp_pallas.1} parent=31 // pred_check
          %p462 = pneg %p113
        $region46: #{_vp_pallas.1} parent=31 // pred_check_branch
          %464 = sbr.rel (%p462) target = $region48
        $region47: #{_vp_pallas.1} parent=31 // pred_region
          %s466 = ssub.s32 128, 128
          %467 = vsyncadd %s448, %s466
          %s468 = smul.addr %s27, 128
          %s469 = scalar_lea.hbm %s3, %s468
          %s471 = sshll.u32 %s451, 4
          %s472 = int_to_ptr.vmem [resolvable:$true] %s471
          %474 = dma.vmem_to_hbm [thread:$0]  %s472, 128, %s469, %s448
        $region48: #{_vp_pallas.1} parent=31 // pred_fallthru
          _
        // Predicated region
        $region49: #{_vp_pallas.1} parent=31 // pred_check
          %p475 = pneg %p139
        $region50: #{_vp_pallas.1} parent=31 // pred_check_branch
          %477 = sbr.rel (%p475) target = $region52
        $region51: #{_vp_pallas.1} parent=31 // pred_region
          %s479 = ssub.s32 128, 128
          %480 = vsyncadd %s453, %s479
          %s481 = smul.addr %s27, 128
          %s482 = scalar_lea.hbm %s4, %s481
          %s484 = sshll.u32 %s456, 4
          %s485 = int_to_ptr.vmem [resolvable:$true] %s484
          %487 = dma.vmem_to_hbm [thread:$0]  %s485, 128, %s482, %s453
        $region52: #{_vp_pallas.1} parent=31 // pred_fallthru
          _
        // Predicated region
        $region53: #{_vp_pallas.1} parent=31 // pred_check
          %p488 = pneg %p165
        $region54: #{_vp_pallas.1} parent=31 // pred_check_branch
          %490 = sbr.rel (%p488) target = $region56
        $region55: #{_vp_pallas.1} parent=31 // pred_region
          %s492 = ssub.s32 128, 128
          %493 = vsyncadd %s458, %s492
          %s494 = smul.addr %s27, 128
          %s495 = scalar_lea.hbm %s5, %s494
          %s497 = sshll.u32 %s461, 4
          %s498 = int_to_ptr.vmem [resolvable:$true] %s497
          %500 = dma.vmem_to_hbm [thread:$0]  %s498, 128, %s495, %s458
        $region56: #{_vp_pallas.1} parent=31 // pred_fallthru
          _
      $region32: #{_vp_pallas.1} parent=5 // pred_fallthru
        _
      %p501 = scmp.le.s32.totalorder 2, %s22
      // Predicated region
      $region57: #{_vp_pallas.1} parent=5 // pred_check
        %p502 = pneg %p501
      $region58: #{_vp_pallas.1} parent=5 // pred_check_branch
        %504 = sbr.rel (%p502) target = $region60
      $region59: #{_vp_pallas.1} parent=5 // pred_region
        %s505 = ssub.s32 %s22, 2
        // Predicated region
        $region61: #{_vp_pallas.1} parent=59 // pred_check
          %p506 = pneg %p119
        $region62: #{_vp_pallas.1} parent=59 // pred_check_branch
          %508 = sbr.rel (%p506) target = $region64
        $region63: #{_vp_pallas.1} parent=59 // pred_region
          %s509 = sand.u32 %s104, 1
          %s510 = scalar_lea.sflag [#allocation4], %s509
          %s511 = sand.u32 %s104, 1
          %s512 = smul.addr %s511, 8
          %s513 = scalar_lea.vmem [#allocation8], %s512
          %514 = dma.done %s510, 128
        $region64: #{_vp_pallas.1} parent=59 // pred_fallthru
          _
        // Predicated region
        $region65: #{_vp_pallas.1} parent=59 // pred_check
          %p515 = pneg %p145
        $region66: #{_vp_pallas.1} parent=59 // pred_check_branch
          %517 = sbr.rel (%p515) target = $region68
        $region67: #{_vp_pallas.1} parent=59 // pred_region
          %s518 = sand.u32 %s28, 1
          %s519 = scalar_lea.sflag [#allocation10], %s518
          %s520 = sand.u32 %s130, 1
          %s521 = smul.addr %s520, 8
          %s522 = scalar_lea.vmem [#allocation9], %s521
          %523 = dma.done %s519, 128
        $region68: #{_vp_pallas.1} parent=59 // pred_fallthru
          _
        // Predicated region
        $region69: #{_vp_pallas.1} parent=59 // pred_check
          %p524 = pneg %p171
        $region70: #{_vp_pallas.1} parent=59 // pred_check_branch
          %526 = sbr.rel (%p524) target = $region72
        $region71: #{_vp_pallas.1} parent=59 // pred_region
          %s527 = sand.u32 %s28, 1
          %s528 = scalar_lea.sflag [#allocation10], %s527
          %s529 = sand.u32 %s156, 1
          %s530 = smul.addr %s529, 8
          %s531 = scalar_lea.vmem [#allocation11], %s530
          %532 = dma.done %s528, 128
        $region72: #{_vp_pallas.1} parent=59 // pred_fallthru
          _
      $region60: #{_vp_pallas.1} parent=5 // pred_fallthru
        _
    $region6: #{_vp_pallas.1} parent=1 // loop_footer
      %s26 = sadd.s32 1, %s22
    $region7: #{_vp_pallas.1} parent=1 // loop_footer_branch
      %21 = sbr.rel target = $region3
    $region8: #{_vp_pallas.1} parent=1 // loop_exit
      _
    %533 = vsyncpa [#allocation3], 1
    %s534 = scalar_lea.sflag [#allocation3], 1
    %535 = vsyncpa %s534, 1
    %536 = vsyncpa [#allocation6], 1
    %537 = vsyncpa [#allocation4], 1
    %s538 = scalar_lea.sflag [#allocation4], 1
    %539 = vsyncpa %s538, 1
    %540 = vsyncpa [#allocation10], 1
    %s541 = scalar_lea.sflag [#allocation10], 1
    %542 = vsyncpa %s541, 1

</llo_original>
